<compile_context>
chip_gen: v6e
topology: v6e:2x2x1
jax: 0.10.0
libtpu: 0.0.40
codegen_flags: <defaults>
</compile_context>

<pallas_src>
import jax
import jax.numpy as jnp
from jax.experimental import pallas as pl
from jax.experimental.pallas import tpu as pltpu

MAP_SIZE = (10, 10)                 # map_size in the PyTorch module
NB_FILTERS_3X3 = 8                  # config2.nb_filters_3x3 (synthetic, small)
VALUE_HEAD_HIDDEN = 32              # config2.value_head_hidden_layer_size (synthetic)
BN_EPS = 1e-5
MAX_TILE = 2048                     # batch-tile cap (2 * tile * C * HW * 4B ~= 12.5 MiB)


def _round_up(n, m):
    return ((n + m - 1) // m) * m


def _choose_tile(b):
    if b <= 16:
        return _round_up(max(b, 8), 8)
    # >= 2 tiles whenever possible so v7x's two TensorCores both get work; cap the tile
    # so double-buffered x blocks stay well inside scoped VMEM on every generation.
    return min(MAX_TILE, _round_up(pl.cdiv(b, 2), 8))


def value_head_kernel(x_ref, convw_ref, convb_ref, fc1w_ref, fc1b_ref,
                      fc2w_ref, fc2b_ref, o_ref):
    # x_ref:     (TB, C, HW)  VMEM   conv input, spatial flattened (HW = 100, unpadded)
    # convw_ref: (1, C)       SMEM   1x1 conv weight with BN scale folded in
    # convb_ref: (1, 1)       SMEM   folded conv/BN bias
    # fc1w_ref:  (HW, H1)     VMEM   fc1 weight (transposed)
    # fc1b_ref:  (1, H1)      VMEM
    # fc2w_ref:  (1, H1)      VMEM   fc2 weight as a row vector (VPU path)
    # fc2b_ref:  (1, 1)       SMEM
    # o_ref:     (TB, 1)      VMEM   per-tile output column
    C = x_ref.shape[1]

    # 1x1 conv (+ folded eval-mode BN): unrolled SMEM-scalar * vreg sum over C.
    # No (TB, C, HW) product temp, no cross-sublane reduce — pure VALU filler.
    conv = x_ref[:, 0, :] * convw_ref[0, 0]
    for c in range(1, C):
        conv = conv + x_ref[:, c, :] * convw_ref[0, c]
    conv = conv + convb_ref[0, 0]
    y = jnp.maximum(conv, 0.0)                                      # (TB, HW)  ReLU1

    # fc1 + ReLU on the MXU (K = HW = 100; Mosaic pads/masks K internally).
    h = jnp.dot(y, fc1w_ref[...], preferred_element_type=jnp.float32) + fc1b_ref[...]
    h = jnp.maximum(h, 0.0)                                         # (TB, H1)

    # fc2 on the VPU/XLU (don't feed the MXU a 1-column matmul), then tanh.
    o = jnp.sum(h * fc2w_ref[...], axis=-1, keepdims=True) + fc2b_ref[0, 0]   # (TB, 1)
    o_ref[...] = jnp.tanh(o)


def value_head_forward(x, params, *, tb=None):
    """x: (B, C, H, W) float32 in NCHW (PyTorch convention)."""
    B, C, H, W = x.shape
    HW = H * W
    hw_in, hidden = params["fc1_w"].shape
    assert hw_in == HW

    tb = tb or _choose_tile(B)

    # No host-side zero pad of x: reshape is free and the BlockSpec handles the rest.
    # Only a tiny batch (< one tile) gets a cheap round_up pad so no block exceeds the
    # array; large batches use a ragged last block (rows >= B are sliced off below).
    x_flat = x.reshape(B, C, HW)
    if B < tb:
        x_in = jnp.zeros((tb, C, HW), x.dtype).at[:B].set(x_flat)
    else:
        x_in = x_flat
    B_eff = x_in.shape[0]
    n_tiles = pl.cdiv(B_eff, tb)

    # Fold eval-mode BatchNorm into the 1x1 conv (inference semantics only).
    gamma, beta, mean, var = [params["bn"][0, i] for i in range(4)]
    scale = gamma * jax.lax.rsqrt(var + BN_EPS)
    conv_w = params["conv_w"] * scale                                   # (1, C)
    conv_b = ((params["conv_b"][0, 0] - mean) * scale + beta).reshape(1, 1)

    fc1_w = params["fc1_w"]                                             # (HW, H1)
    fc1_b = params["fc1_b"].reshape(1, hidden)
    fc2_w = params["fc2_w"].reshape(1, hidden)                          # row vector
    fc2_b = params["fc2_b"].reshape(1, 1)

    weight_bytes = 4 * (C + 1 + HW * hidden + hidden + hidden + 1)
    cost = pl.CostEstimate(
        flops=2 * B_eff * (C * HW + HW * hidden + hidden),
        transcendentals=B_eff,
        bytes_accessed=B_eff * C * HW * 4 + B_eff * 4 + weight_bytes,
    )

    smem = pltpu.MemorySpace.SMEM
    out = pl.pallas_call(
        value_head_kernel,
        out_shape=jax.ShapeDtypeStruct((n_tiles * tb, 1), jnp.float32),
        grid=(n_tiles,),
        in_specs=[
            pl.BlockSpec((tb, C, HW), lambda i: (i, 0, 0)),              # x (batch-tiled)
            pl.BlockSpec((1, C), lambda i: (0, 0), memory_space=smem),   # conv_w (SMEM)
            pl.BlockSpec((1, 1), lambda i: (0, 0), memory_space=smem),   # conv_b scalar
            pl.BlockSpec((HW, hidden), lambda i: (0, 0)),                # fc1_w (resident)
            pl.BlockSpec((1, hidden), lambda i: (0, 0)),                 # fc1_b
            pl.BlockSpec((1, hidden), lambda i: (0, 0)),                 # fc2_w row
            pl.BlockSpec((1, 1), lambda i: (0, 0), memory_space=smem),   # fc2_b scalar
        ],
        out_specs=pl.BlockSpec((tb, 1), lambda i: (i, 0)),               # tiny column tile
        compiler_params=pltpu.CompilerParams(
            dimension_semantics=("parallel",),
            vmem_limit_bytes=32 * 1024 * 1024),
        cost_estimate=cost,
    )(x_in, conv_w, conv_b, fc1_w, fc1_b, fc2_w, fc2_b)

    return out[:B]


def make_params(key, c_in, hw, hidden):
    ks = jax.random.split(key, 8)
    conv_w = jax.random.normal(ks[0], (1, c_in), jnp.float32) * 0.1
    conv_b = jax.random.normal(ks[1], (1, 1), jnp.float32) * 0.1
    # BN (eval mode): [gamma, beta, running_mean, running_var]
    gamma = 1.0 + 0.1 * jax.random.normal(ks[2], (), jnp.float32)
    beta = 0.1 * jax.random.normal(ks[3], (), jnp.float32)
    r_mean = 0.05 * jax.random.normal(ks[4], (), jnp.float32)
    r_var = 1.0 + 0.1 * jnp.abs(jax.random.normal(ks[5], (), jnp.float32))
    bn = jnp.stack([gamma, beta, r_mean, r_var]).reshape(1, 4)
    fc1_w = jax.random.normal(ks[6], (hw, hidden), jnp.float32) * 0.1
    fc1_b = jnp.linspace(-0.1, 0.1, hidden, dtype=jnp.float32).reshape(1, hidden)
    fc2_w = jax.random.normal(ks[7], (hidden, 1), jnp.float32) * 0.1
    fc2_b = jnp.array([[0.05]], jnp.float32)
    return dict(conv_w=conv_w, conv_b=conv_b, bn=bn,
                fc1_w=fc1_w, fc1_b=fc1_b, fc2_w=fc2_w, fc2_b=fc2_b)


def reference_forward(x, p):
    """Pure-JAX reference mirroring the PyTorch forward (eval-mode BN, unfused)."""
    B, C, H, W = x.shape
    conv = jnp.einsum("bchw,c->bhw", x, p["conv_w"][0]) + p["conv_b"][0, 0]   # (B,H,W)
    gamma, beta, mean, var = [p["bn"][0, i] for i in range(4)]
    y = (conv - mean) * (gamma / jnp.sqrt(var + BN_EPS)) + beta
    y = jnp.maximum(y, 0.0).reshape(B, H * W)
    h = jnp.maximum(y @ p["fc1_w"] + p["fc1_b"], 0.0)
    return jnp.tanh(h @ p["fc2_w"] + p["fc2_b"])


if __name__ == "__main__":
    B = 2
    H, W = MAP_SIZE
    C = NB_FILTERS_3X3
    HW = H * W

    key = jax.random.PRNGKey(0)
    kx, kp = jax.random.split(key)
    x = jax.random.normal(kx, (B, C, H, W), jnp.float32)
    params = make_params(kp, C, HW, VALUE_HEAD_HIDDEN)

    out = value_head_forward(x, params)
    out = jax.block_until_ready(out)

    ref = reference_forward(x, params)
    assert out.shape == (B, 1), out.shape
    assert jnp.allclose(out, ref, atol=1e-5, rtol=1e-4), (out, ref)
    # TODO(synk): training-mode BatchNorm (batch statistics + running-stat update) is not
    # implemented; eval-mode stats are folded into the 1x1 conv, matching inference.
    print("KERNEL_OK")
</pallas_src>

<mosaic_0001>
module attributes {stable_mosaic.version = 11 : i64} {
  func.func @value_head_kernel(%arg0: i32, %arg1: memref<8x8x100xf32, #tpu.memory_space<vmem>>, %arg2: memref<1x8xf32, #tpu.memory_space<smem>>, %arg3: memref<1x1xf32, #tpu.memory_space<smem>>, %arg4: memref<100x32xf32, #tpu.memory_space<vmem>>, %arg5: memref<1x32xf32, #tpu.memory_space<vmem>>, %arg6: memref<1x32xf32, #tpu.memory_space<vmem>>, %arg7: memref<1x1xf32, #tpu.memory_space<smem>>, %arg8: memref<8x1xf32, #tpu.memory_space<vmem>>) attributes {dimension_semantics = [#tpu.dimension_semantics<parallel>], iteration_bounds = array<i64: 1>, scalar_prefetch = 0 : i64, scratch_operands = 0 : i64, tpu.core_type = #tpu.core_type<tc>, window_params = [{transform_indices = @transform_0, window_bounds = array<i64: 8, 8, 100>}, {transform_indices = @transform_1, window_bounds = array<i64: 1, 8>}, {transform_indices = @transform_2, window_bounds = array<i64: 1, 1>}, {pipeline_mode = #tpu.pipeline_mode<synchronous>, transform_indices = @transform_3, window_bounds = array<i64: 100, 32>}, {pipeline_mode = #tpu.pipeline_mode<synchronous>, transform_indices = @transform_4, window_bounds = array<i64: 1, 32>}, {pipeline_mode = #tpu.pipeline_mode<synchronous>, transform_indices = @transform_5, window_bounds = array<i64: 1, 32>}, {transform_indices = @transform_6, window_bounds = array<i64: 1, 1>}, {transform_indices = @transform_7, window_bounds = array<i64: 8, 1>}]} {
    %c0 = arith.constant 0 : index
    %c0_0 = arith.constant 0 : index
    %c0_1 = arith.constant 0 : index
    %0 = vector.load %arg1[%c0, %c0_0, %c0_1] : memref<8x8x100xf32, #tpu.memory_space<vmem>>, vector<8x1x100xf32>
    %1 = vector.shape_cast %0 : vector<8x1x100xf32> to vector<8x100xf32>
    %c0_2 = arith.constant 0 : index
    %c0_3 = arith.constant 0 : index
    %2 = memref.load %arg2[%c0_2, %c0_3] : memref<1x8xf32, #tpu.memory_space<smem>>
    %3 = vector.broadcast %2 : f32 to vector<8x100xf32>
    %4 = arith.mulf %1, %3 : vector<8x100xf32>
    %c0_4 = arith.constant 0 : index
    %c1 = arith.constant 1 : index
    %c0_5 = arith.constant 0 : index
    %5 = vector.load %arg1[%c0_4, %c1, %c0_5] : memref<8x8x100xf32, #tpu.memory_space<vmem>>, vector<8x1x100xf32>
    %6 = vector.shape_cast %5 : vector<8x1x100xf32> to vector<8x100xf32>
    %c0_6 = arith.constant 0 : index
    %c1_7 = arith.constant 1 : index
    %7 = memref.load %arg2[%c0_6, %c1_7] : memref<1x8xf32, #tpu.memory_space<smem>>
    %8 = vector.broadcast %7 : f32 to vector<8x100xf32>
    %9 = arith.mulf %6, %8 : vector<8x100xf32>
    %10 = arith.addf %4, %9 : vector<8x100xf32>
    %c0_8 = arith.constant 0 : index
    %c2 = arith.constant 2 : index
    %c0_9 = arith.constant 0 : index
    %11 = vector.load %arg1[%c0_8, %c2, %c0_9] : memref<8x8x100xf32, #tpu.memory_space<vmem>>, vector<8x1x100xf32>
    %12 = vector.shape_cast %11 : vector<8x1x100xf32> to vector<8x100xf32>
    %c0_10 = arith.constant 0 : index
    %c2_11 = arith.constant 2 : index
    %13 = memref.load %arg2[%c0_10, %c2_11] : memref<1x8xf32, #tpu.memory_space<smem>>
    %14 = vector.broadcast %13 : f32 to vector<8x100xf32>
    %15 = arith.mulf %12, %14 : vector<8x100xf32>
    %16 = arith.addf %10, %15 : vector<8x100xf32>
    %c0_12 = arith.constant 0 : index
    %c3 = arith.constant 3 : index
    %c0_13 = arith.constant 0 : index
    %17 = vector.load %arg1[%c0_12, %c3, %c0_13] : memref<8x8x100xf32, #tpu.memory_space<vmem>>, vector<8x1x100xf32>
    %18 = vector.shape_cast %17 : vector<8x1x100xf32> to vector<8x100xf32>
    %c0_14 = arith.constant 0 : index
    %c3_15 = arith.constant 3 : index
    %19 = memref.load %arg2[%c0_14, %c3_15] : memref<1x8xf32, #tpu.memory_space<smem>>
    %20 = vector.broadcast %19 : f32 to vector<8x100xf32>
    %21 = arith.mulf %18, %20 : vector<8x100xf32>
    %22 = arith.addf %16, %21 : vector<8x100xf32>
    %c0_16 = arith.constant 0 : index
    %c4 = arith.constant 4 : index
    %c0_17 = arith.constant 0 : index
    %23 = vector.load %arg1[%c0_16, %c4, %c0_17] : memref<8x8x100xf32, #tpu.memory_space<vmem>>, vector<8x1x100xf32>
    %24 = vector.shape_cast %23 : vector<8x1x100xf32> to vector<8x100xf32>
    %c0_18 = arith.constant 0 : index
    %c4_19 = arith.constant 4 : index
    %25 = memref.load %arg2[%c0_18, %c4_19] : memref<1x8xf32, #tpu.memory_space<smem>>
    %26 = vector.broadcast %25 : f32 to vector<8x100xf32>
    %27 = arith.mulf %24, %26 : vector<8x100xf32>
    %28 = arith.addf %22, %27 : vector<8x100xf32>
    %c0_20 = arith.constant 0 : index
    %c5 = arith.constant 5 : index
    %c0_21 = arith.constant 0 : index
    %29 = vector.load %arg1[%c0_20, %c5, %c0_21] : memref<8x8x100xf32, #tpu.memory_space<vmem>>, vector<8x1x100xf32>
    %30 = vector.shape_cast %29 : vector<8x1x100xf32> to vector<8x100xf32>
    %c0_22 = arith.constant 0 : index
    %c5_23 = arith.constant 5 : index
    %31 = memref.load %arg2[%c0_22, %c5_23] : memref<1x8xf32, #tpu.memory_space<smem>>
    %32 = vector.broadcast %31 : f32 to vector<8x100xf32>
    %33 = arith.mulf %30, %32 : vector<8x100xf32>
    %34 = arith.addf %28, %33 : vector<8x100xf32>
    %c0_24 = arith.constant 0 : index
    %c6 = arith.constant 6 : index
    %c0_25 = arith.constant 0 : index
    %35 = vector.load %arg1[%c0_24, %c6, %c0_25] : memref<8x8x100xf32, #tpu.memory_space<vmem>>, vector<8x1x100xf32>
    %36 = vector.shape_cast %35 : vector<8x1x100xf32> to vector<8x100xf32>
    %c0_26 = arith.constant 0 : index
    %c6_27 = arith.constant 6 : index
    %37 = memref.load %arg2[%c0_26, %c6_27] : memref<1x8xf32, #tpu.memory_space<smem>>
    %38 = vector.broadcast %37 : f32 to vector<8x100xf32>
    %39 = arith.mulf %36, %38 : vector<8x100xf32>
    %40 = arith.addf %34, %39 : vector<8x100xf32>
    %c0_28 = arith.constant 0 : index
    %c7 = arith.constant 7 : index
    %c0_29 = arith.constant 0 : index
    %41 = vector.load %arg1[%c0_28, %c7, %c0_29] : memref<8x8x100xf32, #tpu.memory_space<vmem>>, vector<8x1x100xf32>
    %42 = vector.shape_cast %41 : vector<8x1x100xf32> to vector<8x100xf32>
    %c0_30 = arith.constant 0 : index
    %c7_31 = arith.constant 7 : index
    %43 = memref.load %arg2[%c0_30, %c7_31] : memref<1x8xf32, #tpu.memory_space<smem>>
    %44 = vector.broadcast %43 : f32 to vector<8x100xf32>
    %45 = arith.mulf %42, %44 : vector<8x100xf32>
    %46 = arith.addf %40, %45 : vector<8x100xf32>
    %c0_32 = arith.constant 0 : index
    %c0_33 = arith.constant 0 : index
    %47 = memref.load %arg3[%c0_32, %c0_33] : memref<1x1xf32, #tpu.memory_space<smem>>
    %48 = vector.broadcast %47 : f32 to vector<8x100xf32>
    %49 = arith.addf %46, %48 : vector<8x100xf32>
    %cst = arith.constant 0.000000e+00 : f32
    %50 = vector.broadcast %cst : f32 to vector<8x100xf32>
    %51 = arith.maximumf %49, %50 : vector<8x100xf32>
    %c0_34 = arith.constant 0 : index
    %c0_35 = arith.constant 0 : index
    %52 = vector.load %arg4[%c0_34, %c0_35] : memref<100x32xf32, #tpu.memory_space<vmem>>, vector<100x32xf32>
    %cst_36 = arith.constant dense<0.000000e+00> : vector<8x32xf32>
    %53 = tpu.matmul %51, %52, %cst_36 {dimension_numbers = #tpu.dot_dimension_numbers<[1], [0], [0], [1], [0, 0, 1, 1], [], []>} : vector<8x100xf32>, vector<100x32xf32>, vector<8x32xf32> -> vector<8x32xf32>
    %c0_37 = arith.constant 0 : index
    %c0_38 = arith.constant 0 : index
    %54 = vector.load %arg5[%c0_37, %c0_38] : memref<1x32xf32, #tpu.memory_space<vmem>>, vector<1x32xf32>
    %55 = vector.broadcast %54 : vector<1x32xf32> to vector<8x32xf32>
    %56 = arith.addf %53, %55 : vector<8x32xf32>
    %cst_39 = arith.constant 0.000000e+00 : f32
    %57 = vector.broadcast %cst_39 : f32 to vector<8x32xf32>
    %58 = arith.maximumf %56, %57 : vector<8x32xf32>
    %c0_40 = arith.constant 0 : index
    %c0_41 = arith.constant 0 : index
    %59 = vector.load %arg6[%c0_40, %c0_41] : memref<1x32xf32, #tpu.memory_space<vmem>>, vector<1x32xf32>
    %60 = vector.broadcast %59 : vector<1x32xf32> to vector<8x32xf32>
    %61 = arith.mulf %58, %60 : vector<8x32xf32>
    %cst_42 = arith.constant dense<0.000000e+00> : vector<8xf32>
    %62 = vector.multi_reduction <add>, %61, %cst_42 [1] : vector<8x32xf32> to vector<8xf32>
    %63 = vector.shape_cast %62 : vector<8xf32> to vector<8x1xf32>
    %c0_43 = arith.constant 0 : index
    %c0_44 = arith.constant 0 : index
    %64 = memref.load %arg7[%c0_43, %c0_44] : memref<1x1xf32, #tpu.memory_space<smem>>
    %65 = vector.broadcast %64 : f32 to vector<8x1xf32>
    %66 = arith.addf %63, %65 : vector<8x1xf32>
    %67 = math.tanh %66 : vector<8x1xf32>
    %c0_45 = arith.constant 0 : index
    %c0_46 = arith.constant 0 : index
    %68 = vector.load %arg8[%c0_45, %c0_46] : memref<8x1xf32, #tpu.memory_space<vmem>>, vector<8x1xf32>
    tpu.vector_store %arg8[%c0_45, %c0_46], %67 {strides = array<i32>} : memref<8x1xf32, #tpu.memory_space<vmem>>, vector<8x1xf32>,
    return
  }
  func.func @transform_0(%arg0: i32) -> (i32, i32, i32) {
    %c0_i32 = arith.constant 0 : i32
    %c0_i32_0 = arith.constant 0 : i32
    %c0_i32_1 = arith.constant 0 : i32
    return %arg0, %c0_i32, %c0_i32_0 : i32, i32, i32
  }
  func.func @transform_1(%arg0: i32) -> (i32, i32) {
    %c0_i32 = arith.constant 0 : i32
    %c0_i32_0 = arith.constant 0 : i32
    %c0_i32_1 = arith.constant 0 : i32
    return %c0_i32, %c0_i32_0 : i32, i32
  }
  func.func @transform_2(%arg0: i32) -> (i32, i32) {
    %c0_i32 = arith.constant 0 : i32
    %c0_i32_0 = arith.constant 0 : i32
    %c0_i32_1 = arith.constant 0 : i32
    return %c0_i32, %c0_i32_0 : i32, i32
  }
  func.func @transform_3(%arg0: i32) -> (i32, i32) {
    %c0_i32 = arith.constant 0 : i32
    %c0_i32_0 = arith.constant 0 : i32
    %c0_i32_1 = arith.constant 0 : i32
    return %c0_i32, %c0_i32_0 : i32, i32
  }
  func.func @transform_4(%arg0: i32) -> (i32, i32) {
    %c0_i32 = arith.constant 0 : i32
    %c0_i32_0 = arith.constant 0 : i32
    %c0_i32_1 = arith.constant 0 : i32
    return %c0_i32, %c0_i32_0 : i32, i32
  }
  func.func @transform_5(%arg0: i32) -> (i32, i32) {
    %c0_i32 = arith.constant 0 : i32
    %c0_i32_0 = arith.constant 0 : i32
    %c0_i32_1 = arith.constant 0 : i32
    return %c0_i32, %c0_i32_0 : i32, i32
  }
  func.func @transform_6(%arg0: i32) -> (i32, i32) {
    %c0_i32 = arith.constant 0 : i32
    %c0_i32_0 = arith.constant 0 : i32
    %c0_i32_1 = arith.constant 0 : i32
    return %c0_i32, %c0_i32_0 : i32, i32
  }
  func.func @transform_7(%arg0: i32) -> (i32, i32) {
    %c0_i32 = arith.constant 0 : i32
    %c0_i32_0 = arith.constant 0 : i32
    return %arg0, %c0_i32 : i32, i32
  }
}

</mosaic_0001>

<llo_original>
// kernel: tpu_custom_call.1
$region0: #{tpu_custom_call.1}
  #allocation0 [shape = 'u32[]', space=smem, size = 0x4, offset = 0x4, fixed_abs, tag = 'smem constant byte address 0x4 - core index']
  #allocation1 [shape = 'u32[144,128]{1,0:T(1,128)}', space=vmem, size = 0x12000, scoped, tag = 'internal scratch']
  #allocation2 [shape = 'f32[1,1]{1,0:T(1,128)S(6)}', space=smem, size = 0x200, scoped, tag = 'scoped memory for tpu_custom_call.1']
  #allocation3 [shape = 'f32[1,1]{1,0:T(1,128)S(6)}', space=smem, size = 0x200, scoped, tag = 'scoped memory for tpu_custom_call.1']
  %s0 = inlined_call_operand.vmem [shape: f32[8,8,100], index: 0, kind: input, shape index: {}]
  %s1 = inlined_call_operand.vmem [shape: f32[1,8], index: 1, kind: input, shape index: {}]
  %s2 = inlined_call_operand.<no memory space> [shape: f32[1,1], index: 2, kind: input, shape index: {}]
  %s3 = inlined_call_operand.vmem [shape: f32[100,32], index: 3, kind: input, shape index: {}]
  %s4 = inlined_call_operand.vmem [shape: f32[1,32], index: 4, kind: input, shape index: {}]
  %s5 = inlined_call_operand.vmem [shape: f32[1,32], index: 5, kind: input, shape index: {}]
  %s6 = inlined_call_operand.<no memory space> [shape: f32[1,1], index: 6, kind: input, shape index: {}]
  %s7 = inlined_call_operand.vmem [shape: f32[8,1], index: 7, kind: output, shape index: {}]
  %s8 = sld [smem:[#allocation0]]
  $region42: #{tpu_custom_call.1} parent=0
    _
  %s10 = ssub.s32 1, %s8
  %s11 = scalar_select 0, %s10, %s8
  %12 = sst [smem:[#allocation2]] %s2
  %13 = sst [smem:[#allocation3]] %s6
  $region1: #{tpu_custom_call.1} parent=0
    #allocation4 [shape = 'u8[512]{0}', space=smem, size = 0x200, scoped, tag = 'input window, operand 1, single buffered']
    #allocation5 [shape = 's32[1]{0}', space=sflag, size = 0x4, scoped, tag = 'scoped memory for tpu_custom_call.1']
    %14 = vsyncpa [#allocation5], 0
    // Predicated region
    $region2: #{tpu_custom_call.1} parent=1 // pred_check
      _
    $region3: #{tpu_custom_call.1} parent=1 // pred_check_branch
      %16 = sbr.rel (0) target = $region5
    $region4: #{tpu_custom_call.1} parent=1 // pred_region
      _
    $region5: #{tpu_custom_call.1} parent=1 // pred_fallthru
      _
    // Predicated region
    $region6: #{tpu_custom_call.1} parent=1 // pred_check
      _
    $region7: #{tpu_custom_call.1} parent=1 // pred_check_branch
      %18 = sbr.rel (0) target = $region9
    $region8: #{tpu_custom_call.1} parent=1 // pred_region
      %s20 = ssub.s32 16, 16
      %21 = vsyncadd [#allocation5], %s20
      %s23 = sshll.u32 %s1, 4
      %s24 = int_to_ptr.vmem [resolvable:$true] %s23
      %26 = dma.vmem_to_smem %s24, 16, [#allocation4], [#allocation5]
    $region9: #{tpu_custom_call.1} parent=1 // pred_fallthru
      _
    // Predicated region
    $region10: #{tpu_custom_call.1} parent=1 // pred_check
      _
    $region11: #{tpu_custom_call.1} parent=1 // pred_check_branch
      %28 = sbr.rel (0) target = $region13
    $region12: #{tpu_custom_call.1} parent=1 // pred_region
      _
    $region13: #{tpu_custom_call.1} parent=1 // pred_fallthru
      _
    // Predicated region
    $region14: #{tpu_custom_call.1} parent=1 // pred_check
      _
    $region15: #{tpu_custom_call.1} parent=1 // pred_check_branch
      %30 = sbr.rel (0) target = $region17
    $region16: #{tpu_custom_call.1} parent=1 // pred_region
      _
    $region17: #{tpu_custom_call.1} parent=1 // pred_fallthru
      _
    // Predicated region
    $region18: #{tpu_custom_call.1} parent=1 // pred_check
      _
    $region19: #{tpu_custom_call.1} parent=1 // pred_check_branch
      %32 = sbr.rel (0) target = $region21
    $region20: #{tpu_custom_call.1} parent=1 // pred_region
      _
    $region21: #{tpu_custom_call.1} parent=1 // pred_fallthru
      _
    // Predicated region
    $region22: #{tpu_custom_call.1} parent=1 // pred_check
      _
    $region23: #{tpu_custom_call.1} parent=1 // pred_check_branch
      %34 = sbr.rel (0) target = $region25
    $region24: #{tpu_custom_call.1} parent=1 // pred_region
      _
    $region25: #{tpu_custom_call.1} parent=1 // pred_fallthru
      _
    // Predicated region
    $region26: #{tpu_custom_call.1} parent=1 // pred_check
      _
    $region27: #{tpu_custom_call.1} parent=1 // pred_check_branch
      %36 = sbr.rel (0) target = $region29
    $region28: #{tpu_custom_call.1} parent=1 // pred_region
      _
    $region29: #{tpu_custom_call.1} parent=1 // pred_fallthru
      _
    // Predicated region
    $region30: #{tpu_custom_call.1} parent=1 // pred_check
      _
    $region31: #{tpu_custom_call.1} parent=1 // pred_check_branch
      %38 = sbr.rel (0) target = $region33
    $region32: #{tpu_custom_call.1} parent=1 // pred_region
      %39 = dma.done [#allocation5], 16
    $region33: #{tpu_custom_call.1} parent=1 // pred_fallthru
      _
    %40 = sfence
    %v41 = vld [vmem:[%s0] sm:$0x1]
    %v42 = vld [vmem:[%s0 + $0x8] sm:$0x1]
    %v43 = vld [vmem:[%s0 + $0x10] sm:$0x1]
    %v44 = vld [vmem:[%s0 + $0x18] sm:$0x1]
    %v45 = vld [vmem:[%s0 + $0x20] sm:$0x1]
    %v46 = vld [vmem:[%s0 + $0x28] sm:$0x1]
    %v47 = vld [vmem:[%s0 + $0x30] sm:$0x1]
    %v48 = vld [vmem:[%s0 + $0x38] sm:$0x1]
    %s49 = sld [smem:[#allocation4]]
    %v50 = vstv %s49
    %v51 = vmul.f32 %v41, %v50
    %v52 = vmul.f32 %v42, %v50
    %v53 = vmul.f32 %v43, %v50
    %v54 = vmul.f32 %v44, %v50
    %v55 = vmul.f32 %v45, %v50
    %v56 = vmul.f32 %v46, %v50
    %v57 = vmul.f32 %v47, %v50
    %v58 = vmul.f32 %v48, %v50
    %v59 = vld [vmem:[%s0 + $0x1] sm:$0x1]
    %v60 = vld [vmem:[%s0 + $0x9] sm:$0x1]
    %v61 = vld [vmem:[%s0 + $0x11] sm:$0x1]
    %v62 = vld [vmem:[%s0 + $0x19] sm:$0x1]
    %v63 = vld [vmem:[%s0 + $0x21] sm:$0x1]
    %v64 = vld [vmem:[%s0 + $0x29] sm:$0x1]
    %v65 = vld [vmem:[%s0 + $0x31] sm:$0x1]
    %v66 = vld [vmem:[%s0 + $0x39] sm:$0x1]
    %s67 = sld [smem:[#allocation4 + $0x1]]
    %v68 = vstv %s67
    %v69 = vmul.f32 %v59, %v68
    %v70 = vmul.f32 %v60, %v68
    %v71 = vmul.f32 %v61, %v68
    %v72 = vmul.f32 %v62, %v68
    %v73 = vmul.f32 %v63, %v68
    %v74 = vmul.f32 %v64, %v68
    %v75 = vmul.f32 %v65, %v68
    %v76 = vmul.f32 %v66, %v68
    %v77 = vadd.f32 %v51, %v69
    %v78 = vadd.f32 %v52, %v70
    %v79 = vadd.f32 %v53, %v71
    %v80 = vadd.f32 %v54, %v72
    %v81 = vadd.f32 %v55, %v73
    %v82 = vadd.f32 %v56, %v74
    %v83 = vadd.f32 %v57, %v75
    %v84 = vadd.f32 %v58, %v76
    %v85 = vld [vmem:[%s0 + $0x2] sm:$0x1]
    %v86 = vld [vmem:[%s0 + $0xa] sm:$0x1]
    %v87 = vld [vmem:[%s0 + $0x12] sm:$0x1]
    %v88 = vld [vmem:[%s0 + $0x1a] sm:$0x1]
    %v89 = vld [vmem:[%s0 + $0x22] sm:$0x1]
    %v90 = vld [vmem:[%s0 + $0x2a] sm:$0x1]
    %v91 = vld [vmem:[%s0 + $0x32] sm:$0x1]
    %v92 = vld [vmem:[%s0 + $0x3a] sm:$0x1]
    %s93 = sld [smem:[#allocation4 + $0x2]]
    %v94 = vstv %s93
    %v95 = vmul.f32 %v85, %v94
    %v96 = vmul.f32 %v86, %v94
    %v97 = vmul.f32 %v87, %v94
    %v98 = vmul.f32 %v88, %v94
    %v99 = vmul.f32 %v89, %v94
    %v100 = vmul.f32 %v90, %v94
    %v101 = vmul.f32 %v91, %v94
    %v102 = vmul.f32 %v92, %v94
    %v103 = vadd.f32 %v77, %v95
    %v104 = vadd.f32 %v78, %v96
    %v105 = vadd.f32 %v79, %v97
    %v106 = vadd.f32 %v80, %v98
    %v107 = vadd.f32 %v81, %v99
    %v108 = vadd.f32 %v82, %v100
    %v109 = vadd.f32 %v83, %v101
    %v110 = vadd.f32 %v84, %v102
    %v111 = vld [vmem:[%s0 + $0x3] sm:$0x1]
    %v112 = vld [vmem:[%s0 + $0xb] sm:$0x1]
    %v113 = vld [vmem:[%s0 + $0x13] sm:$0x1]
    %v114 = vld [vmem:[%s0 + $0x1b] sm:$0x1]
    %v115 = vld [vmem:[%s0 + $0x23] sm:$0x1]
    %v116 = vld [vmem:[%s0 + $0x2b] sm:$0x1]
    %v117 = vld [vmem:[%s0 + $0x33] sm:$0x1]
    %v118 = vld [vmem:[%s0 + $0x3b] sm:$0x1]
    %s119 = sld [smem:[#allocation4 + $0x3]]
    %v120 = vstv %s119
    %v121 = vmul.f32 %v111, %v120
    %v122 = vmul.f32 %v112, %v120
    %v123 = vmul.f32 %v113, %v120
    %v124 = vmul.f32 %v114, %v120
    %v125 = vmul.f32 %v115, %v120
    %v126 = vmul.f32 %v116, %v120
    %v127 = vmul.f32 %v117, %v120
    %v128 = vmul.f32 %v118, %v120
    %v129 = vadd.f32 %v103, %v121
    %v130 = vadd.f32 %v104, %v122
    %v131 = vadd.f32 %v105, %v123
    %v132 = vadd.f32 %v106, %v124
    %v133 = vadd.f32 %v107, %v125
    %v134 = vadd.f32 %v108, %v126
    %v135 = vadd.f32 %v109, %v127
    %v136 = vadd.f32 %v110, %v128
    %v137 = vld [vmem:[%s0 + $0x4] sm:$0x1]
    %v138 = vld [vmem:[%s0 + $0xc] sm:$0x1]
    %v139 = vld [vmem:[%s0 + $0x14] sm:$0x1]
    %v140 = vld [vmem:[%s0 + $0x1c] sm:$0x1]
    %v141 = vld [vmem:[%s0 + $0x24] sm:$0x1]
    %v142 = vld [vmem:[%s0 + $0x2c] sm:$0x1]
    %v143 = vld [vmem:[%s0 + $0x34] sm:$0x1]
    %v144 = vld [vmem:[%s0 + $0x3c] sm:$0x1]
    %s145 = sld [smem:[#allocation4 + $0x4]]
    %v146 = vstv %s145
    %v147 = vmul.f32 %v137, %v146
    %v148 = vmul.f32 %v138, %v146
    %v149 = vmul.f32 %v139, %v146
    %v150 = vmul.f32 %v140, %v146
    %v151 = vmul.f32 %v141, %v146
    %v152 = vmul.f32 %v142, %v146
    %v153 = vmul.f32 %v143, %v146
    %v154 = vmul.f32 %v144, %v146
    %v155 = vadd.f32 %v129, %v147
    %v156 = vadd.f32 %v130, %v148
    %v157 = vadd.f32 %v131, %v149
    %v158 = vadd.f32 %v132, %v150
    %v159 = vadd.f32 %v133, %v151
    %v160 = vadd.f32 %v134, %v152
    %v161 = vadd.f32 %v135, %v153
    %v162 = vadd.f32 %v136, %v154
    %v163 = vld [vmem:[%s0 + $0x5] sm:$0x1]
    %v164 = vld [vmem:[%s0 + $0xd] sm:$0x1]
    %v165 = vld [vmem:[%s0 + $0x15] sm:$0x1]
    %v166 = vld [vmem:[%s0 + $0x1d] sm:$0x1]
    %v167 = vld [vmem:[%s0 + $0x25] sm:$0x1]
    %v168 = vld [vmem:[%s0 + $0x2d] sm:$0x1]
    %v169 = vld [vmem:[%s0 + $0x35] sm:$0x1]
    %v170 = vld [vmem:[%s0 + $0x3d] sm:$0x1]
    %s171 = sld [smem:[#allocation4 + $0x5]]
    %v172 = vstv %s171
    %v173 = vmul.f32 %v163, %v172
    %v174 = vmul.f32 %v164, %v172
    %v175 = vmul.f32 %v165, %v172
    %v176 = vmul.f32 %v166, %v172
    %v177 = vmul.f32 %v167, %v172
    %v178 = vmul.f32 %v168, %v172
    %v179 = vmul.f32 %v169, %v172
    %v180 = vmul.f32 %v170, %v172
    %v181 = vadd.f32 %v155, %v173
    %v182 = vadd.f32 %v156, %v174
    %v183 = vadd.f32 %v157, %v175
    %v184 = vadd.f32 %v158, %v176
    %v185 = vadd.f32 %v159, %v177
    %v186 = vadd.f32 %v160, %v178
    %v187 = vadd.f32 %v161, %v179
    %v188 = vadd.f32 %v162, %v180
    %v189 = vld [vmem:[%s0 + $0x6] sm:$0x1]
    %v190 = vld [vmem:[%s0 + $0xe] sm:$0x1]
    %v191 = vld [vmem:[%s0 + $0x16] sm:$0x1]
    %v192 = vld [vmem:[%s0 + $0x1e] sm:$0x1]
    %v193 = vld [vmem:[%s0 + $0x26] sm:$0x1]
    %v194 = vld [vmem:[%s0 + $0x2e] sm:$0x1]
    %v195 = vld [vmem:[%s0 + $0x36] sm:$0x1]
    %v196 = vld [vmem:[%s0 + $0x3e] sm:$0x1]
    %s197 = sld [smem:[#allocation4 + $0x6]]
    %v198 = vstv %s197
    %v199 = vmul.f32 %v189, %v198
    %v200 = vmul.f32 %v190, %v198
    %v201 = vmul.f32 %v191, %v198
    %v202 = vmul.f32 %v192, %v198
    %v203 = vmul.f32 %v193, %v198
    %v204 = vmul.f32 %v194, %v198
    %v205 = vmul.f32 %v195, %v198
    %v206 = vmul.f32 %v196, %v198
    %v207 = vadd.f32 %v181, %v199
    %v208 = vadd.f32 %v182, %v200
    %v209 = vadd.f32 %v183, %v201
    %v210 = vadd.f32 %v184, %v202
    %v211 = vadd.f32 %v185, %v203
    %v212 = vadd.f32 %v186, %v204
    %v213 = vadd.f32 %v187, %v205
    %v214 = vadd.f32 %v188, %v206
    %v215 = vld [vmem:[%s0 + $0x7] sm:$0x1]
    %v216 = vld [vmem:[%s0 + $0xf] sm:$0x1]
    %v217 = vld [vmem:[%s0 + $0x17] sm:$0x1]
    %v218 = vld [vmem:[%s0 + $0x1f] sm:$0x1]
    %v219 = vld [vmem:[%s0 + $0x27] sm:$0x1]
    %v220 = vld [vmem:[%s0 + $0x2f] sm:$0x1]
    %v221 = vld [vmem:[%s0 + $0x37] sm:$0x1]
    %v222 = vld [vmem:[%s0 + $0x3f] sm:$0x1]
    %s223 = sld [smem:[#allocation4 + $0x7]]
    %v224 = vstv %s223
    %v225 = vmul.f32 %v215, %v224
    %v226 = vmul.f32 %v216, %v224
    %v227 = vmul.f32 %v217, %v224
    %v228 = vmul.f32 %v218, %v224
    %v229 = vmul.f32 %v219, %v224
    %v230 = vmul.f32 %v220, %v224
    %v231 = vmul.f32 %v221, %v224
    %v232 = vmul.f32 %v222, %v224
    %v233 = vadd.f32 %v207, %v225
    %v234 = vadd.f32 %v208, %v226
    %v235 = vadd.f32 %v209, %v227
    %v236 = vadd.f32 %v210, %v228
    %v237 = vadd.f32 %v211, %v229
    %v238 = vadd.f32 %v212, %v230
    %v239 = vadd.f32 %v213, %v231
    %v240 = vadd.f32 %v214, %v232
    %s241 = sld [smem:[#allocation2]]
    %v242 = vstv %s241
    %v243 = vadd.f32 %v233, %v242
    %v244 = vadd.f32 %v234, %v242
    %v245 = vadd.f32 %v235, %v242
    %v246 = vadd.f32 %v236, %v242
    %v247 = vadd.f32 %v237, %v242
    %v248 = vadd.f32 %v238, %v242
    %v249 = vadd.f32 %v239, %v242
    %v250 = vadd.f32 %v240, %v242
    %v251 = vmax.f32 %v243, 0.0
    %v252 = vmax.f32 %v244, 0.0
    %v253 = vmax.f32 %v245, 0.0
    %v254 = vmax.f32 %v246, 0.0
    %v255 = vmax.f32 %v247, 0.0
    %v256 = vmax.f32 %v248, 0.0
    %v257 = vmax.f32 %v249, 0.0
    %v258 = vmax.f32 %v250, 0.0
    %v259 = vld [vmem:[%s3] sm:$0xff]
    %v260 = vld [vmem:[%s3 + $0x8] sm:$0xff]
    %v261 = vld [vmem:[%s3 + $0x10] sm:$0xff]
    %v262 = vld [vmem:[%s3 + $0x18] sm:$0xff]
    %v263 = vld [vmem:[%s3 + $0x20] sm:$0xff]
    %v264 = vld [vmem:[%s3 + $0x28] sm:$0xff]
    %v265 = vld [vmem:[%s3 + $0x30] sm:$0xff]
    %v266 = vld [vmem:[%s3 + $0x38] sm:$0xff]
    %v267 = vld [vmem:[%s3 + $0x40] sm:$0xff]
    %v268 = vld [vmem:[%s3 + $0x48] sm:$0xff]
    %v269 = vld [vmem:[%s3 + $0x50] sm:$0xff]
    %v270 = vld [vmem:[%s3 + $0x58] sm:$0xff]
    %v271 = vld [vmem:[%s3 + $0x60] sm:$0xf]
    %v272 = vld [vmem:[%s4] sm:$0x1]
    %v274 = vlaneseq
    %v275 = vshrl.u32 %v274, 7
    %v276 = vsub.s32 0, %v275
    %v277 = vrot.slane %v272, %v276
    %v287 = vrot.slane %v252, 7
    %vm288 = vcmask 1041409
    %v289 = vsel %vm288, %v287, %v251
    %v290 = vrot.slane %v253, 6
    %vm291 = vcmask 1042434
    %v292 = vsel %vm291, %v290, %v289
    %v293 = vrot.slane %v254, 5
    %vm294 = vcmask 1043459
    %v295 = vsel %vm294, %v293, %v292
    %v296 = vrot.slane %v255, 4
    %vm297 = vcmask 1044484
    %v298 = vsel %vm297, %v296, %v295
    %v299 = vrot.slane %v256, 3
    %vm300 = vcmask 1045509
    %v301 = vsel %vm300, %v299, %v298
    %v302 = vrot.slane %v257, 2
    %vm303 = vcmask 1046534
    %v304 = vsel %vm303, %v302, %v301
    %v305 = vrot.slane %v258, 1
    %vm306 = vcmask 1047559
    %v307 = vsel %vm306, %v305, %v304
    %vm308 = vcmask 818176
    %v309 = vsel %vm308, %v307, 0
    %vm311 = vcmask 1043456
    %v313 = vsel %vm311, %v271, 0
    %315 = vmatprep.subr.mxu0 0.0
    %316 = vmatpush1.msra.mxu0 0.0
    %317 = vmatprep.subr.mxu0 0.0
    %318 = vmatpush1.msra.mxu0 0.0
    %319 = vmatprep.subr.mxu0 0.0
    %320 = vmatpush1.msra.mxu0 0.0
    %321 = vmatprep.subr.mxu0 0.0
    %322 = vmatpush1.msra.mxu0 %v313
    %323 = vmatprep.subr.mxu0 0.0
    %324 = vmatpush1.msra.mxu0 %v270
    %325 = vmatprep.subr.mxu0 0.0
    %326 = vmatpush1.msra.mxu0 %v269
    %327 = vmatprep.subr.mxu0 0.0
    %328 = vmatpush1.msra.mxu0 %v268
    %329 = vmatprep.subr.mxu0 0.0
    %330 = vmatpush1.msra.mxu0 %v267
    %331 = vmatprep.subr.mxu0 0.0
    %332 = vmatpush1.msra.mxu0 %v266
    %333 = vmatprep.subr.mxu0 0.0
    %334 = vmatpush1.msra.mxu0 %v265
    %335 = vmatprep.subr.mxu0 0.0
    %336 = vmatpush1.msra.mxu0 %v264
    %337 = vmatprep.subr.mxu0 0.0
    %338 = vmatpush1.msra.mxu0 %v263
    %339 = vmatprep.subr.mxu0 0.0
    %340 = vmatpush1.msra.mxu0 %v262
    %341 = vmatprep.subr.mxu0 0.0
    %342 = vmatpush1.msra.mxu0 %v261
    %343 = vmatprep.subr.mxu0 0.0
    %344 = vmatpush1.msra.mxu0 %v260
    %345 = vmatprep.subr.mxu0 0.0
    %346 = vmatpush1.msra.mxu0 %v259
    %347 = vmatprep.subr.mxu0 0.0
    %348 = vmatpush2.msra.mxu0 0.0
    %349 = vmatprep.subr.mxu0 0.0
    %350 = vmatpush2.msra.mxu0 0.0
    %351 = vmatprep.subr.mxu0 0.0
    %352 = vmatpush2.msra.mxu0 0.0
    %353 = vmatprep.subr.mxu0 0.0
    %354 = vmatpush2.msra.mxu0 0.0
    %355 = vmatprep.subr.mxu0 0.0
    %356 = vmatpush2.msra.mxu0 0.0
    %357 = vmatprep.subr.mxu0 0.0
    %358 = vmatpush2.msra.mxu0 0.0
    %359 = vmatprep.subr.mxu0 0.0
    %360 = vmatpush2.msra.mxu0 0.0
    %361 = vmatprep.subr.mxu0 0.0
    %362 = vmatpush2.msra.mxu0 0.0
    %363 = vmatprep.subr.mxu0 0.0
    %364 = vmatpush2.msra.mxu0 0.0
    %365 = vmatprep.subr.mxu0 0.0
    %366 = vmatpush2.msra.mxu0 0.0
    %367 = vmatprep.subr.mxu0 0.0
    %368 = vmatpush2.msra.mxu0 0.0
    %369 = vmatprep.subr.mxu0 0.0
    %370 = vmatpush2.msra.mxu0 0.0
    %371 = vmatprep.subr.mxu0 0.0
    %372 = vmatpush2.msra.mxu0 0.0
    %373 = vmatprep.subr.mxu0 0.0
    %374 = vmatpush2.msra.mxu0 0.0
    %375 = vmatprep.subr.mxu0 0.0
    %376 = vmatpush2.msra.mxu0 0.0
    %377 = vmatprep.subr.mxu0 0.0
    %378 = vmatpush2.msra.mxu0 0.0
    %379 = vmatprep.mubr.f32.mxu0 0.0
    %380 = vmatmul.mubr.f32.gmra.mxu0 %v309
    %v381 = vpop.f32.mrf.mxu0
    %v382 = vadd.f32 %v277, %v381
    %v383 = vpop.f32.mrf.mxu0
    %384 = vdwg.mxu0
    %v385 = vmax.f32 %v382, 0.0
    %v386 = vld [vmem:[%s5] sm:$0x1]
    %v388 = vlaneseq
    %v389 = vshrl.u32 %v388, 7
    %v390 = vsub.s32 0, %v389
    %v391 = vrot.slane %v386, %v390
    %v393 = vmul.f32 %v385, %v391
    %vm394 = vcmask 261120
    %v395 = vsel %vm394, %v393, 0.0
    %396 = vadd.xlane.f32.xlu0 %v395
    %v397 = vpop.xlane.xlu0 %396
    %s398 = sld [smem:[#allocation3]]
    %v399 = vstv %s398
    %v400 = vadd.f32 %v397, %v399
    %v401 = vtanh.pop %v400
    %vm402 = vcmask 7168
    %403 = vst.msk [vmem:[%s7] sm:$0xff] %vm402, %v401
    // Predicated region
    $region34: #{tpu_custom_call.1} parent=1 // pred_check
      _
    $region35: #{tpu_custom_call.1} parent=1 // pred_check_branch
      %405 = sbr.rel (0) target = $region37
    $region36: #{tpu_custom_call.1} parent=1 // pred_region
      _
    $region37: #{tpu_custom_call.1} parent=1 // pred_fallthru
      _
    // Predicated region
    $region38: #{tpu_custom_call.1} parent=1 // pred_check
      _
    $region39: #{tpu_custom_call.1} parent=1 // pred_check_branch
      %407 = sbr.rel (0) target = $region41
    $region40: #{tpu_custom_call.1} parent=1 // pred_region
      _
    $region41: #{tpu_custom_call.1} parent=1 // pred_fallthru
      _
    %408 = vsyncpa [#allocation5], 1

</llo_original>
